<compile_context>
chip_gen: v5e
topology: v5e:2x2
jax: 0.10.0
libtpu: 0.0.40
codegen_flags: <defaults>
</compile_context>

<pallas_src>
import jax
import jax.numpy as jnp
from jax import lax
from jax.experimental import pallas as pl
from jax.experimental.pallas import tpu as pltpu


# ----------------------------- tiling policy --------------------------------

_CHUNK = 16                # sublanes per inner-loop chunk (bounds live vregs ~22)
_TILE_QUANTUM = 32         # tile granularity (multiple of _CHUNK and of 8)
_MAX_TILE_SUBLANES = 1024  # 131072 rows / grid step; 8 MiB double-buffered VMEM
_MIN_GRID_STEPS = 4        # keep several steps so v7x megacore splits the grid
                           # and padding waste stays <= ~1/_MIN_GRID_STEPS


def _round_up(x, m):
    return ((x + m - 1) // m) * m


def _cdiv(a, b):
    return -(-a // b)


def _choose_tile_sublanes(nsb_needed, max_tile_sublanes):
    """Tile (in sublanes) adapted to the batch: aim for >= _MIN_GRID_STEPS grid
    steps, capped by the VMEM-safe maximum, quantized to _TILE_QUANTUM."""
    t = _round_up(max(1, _cdiv(nsb_needed, _MIN_GRID_STEPS)), _TILE_QUANTUM)
    return max(_TILE_QUANTUM, min(max_tile_sublanes, t))


# ------------------------------- kernel -------------------------------------


def _mlp_kernel(w2_ref, b2_ref, w3_ref, b3_ref, x_ref, o_ref):
    """Fused fc2 -> ReLU -> fc3 on one batch tile (pure VPU, no MXU).

    x_ref : (6, T, 128) VMEM (f32 or bf16) -- batch tile, lane/sublane dense
    o_ref : (2, T, 128) VMEM f32
    w2_ref: (10, 6) SMEM f32, b2_ref: (10,) SMEM f32   (fc2.weight / fc2.bias)
    w3_ref: (2, 10) SMEM f32, b3_ref: (2,)  SMEM f32   (fc3.weight / fc3.bias)
    """
    tile_sublanes = x_ref.shape[1]
    n_chunks = tile_sublanes // _CHUNK

    # Hoist every weight/bias scalar out of the loops: one SMEM read each per
    # grid step; the inner chunk loop reuses them.
    w2 = [[w2_ref[j, k] for k in range(6)] for j in range(10)]
    b2 = [b2_ref[j] for j in range(10)]
    w3 = [[w3_ref[i, j] for j in range(10)] for i in range(2)]
    b3_0 = b3_ref[0]
    b3_1 = b3_ref[1]

    def body(c, carry):
        row = pl.multiple_of(c * _CHUNK, _CHUNK)
        # Load the 6 feature planes of this 16-sublane chunk (2 f32 vregs each),
        # converting on load if the input was stored as bf16 (HBM-byte saving).
        xs = [x_ref[k, pl.ds(row, _CHUNK), :].astype(jnp.float32)
              for k in range(6)]
        y0 = jnp.zeros_like(xs[0])
        y1 = jnp.zeros_like(xs[0])
        # Unrolled broadcast-MAC chain: h_j = relu(b2[j] + sum_k w2[j,k]*x[k]),
        # consumed immediately by layer 2 so the (10, chunk) hidden never
        # materializes.
        for j in range(10):
            h = xs[0] * w2[j][0]
            for k in range(1, 6):
                h = h + xs[k] * w2[j][k]
            h = jnp.maximum(h + b2[j], 0.0)
            y0 = y0 + h * w3[0][j]
            y1 = y1 + h * w3[1][j]
        o_ref[0, pl.ds(row, _CHUNK), :] = y0 + b3_0
        o_ref[1, pl.ds(row, _CHUNK), :] = y1 + b3_1
        return carry

    # fori_loop (not a Python for) so live ranges stay bounded as tiles grow.
    lax.fori_loop(0, n_chunks, body, None)


def _pallas_forward(x_t3, w2, b2, w3, b3, *, tile_sublanes):
    """x_t3: (6, nsb, 128). Returns (2, nsb, 128) f32."""
    f_in, nsb, lanes = x_t3.shape
    assert f_in == 6 and lanes == 128
    assert tile_sublanes % _CHUNK == 0
    assert nsb % tile_sublanes == 0, "padding policy must make nsb divisible by tile"
    grid = (nsb // tile_sublanes,)
    smem = pl.BlockSpec(memory_space=pltpu.MemorySpace.SMEM)
    return pl.pallas_call(
        _mlp_kernel,
        out_shape=jax.ShapeDtypeStruct((2, nsb, lanes), jnp.float32),
        grid=grid,
        in_specs=[
            smem,  # w2 (10, 6)
            smem,  # b2 (10,)
            smem,  # w3 (2, 10)
            smem,  # b3 (2,)
            pl.BlockSpec((f_in, tile_sublanes, lanes), lambda i: (0, i, 0)),
        ],
        out_specs=pl.BlockSpec((2, tile_sublanes, lanes), lambda i: (0, i, 0)),
        compiler_params=pltpu.CompilerParams(
            dimension_semantics=("parallel",),  # v7x: shard batch tiles over 2 TCs
        ),
    )(w2.astype(jnp.float32), b2.astype(jnp.float32),
      w3.astype(jnp.float32), b3.astype(jnp.float32), x_t3)


# ------------------------------- wrappers ------------------------------------


def _xla_forward(x, w2, b2, w3, b3):
    """Reference / small-batch path, row-major (B, 6) -> (B, 2)."""
    h = jnp.maximum(x @ w2.T + b2, 0.0)
    return h @ w3.T + b3


def _xla_forward_fm(x_fm, w2, b2, w3, b3):
    """Small-batch path, feature-major (6, B) -> (2, B)."""
    h = jnp.maximum(w2 @ x_fm + b2[:, None], 0.0)
    return w3 @ h + b3[:, None]


def net_forward_feature_major(x_fm, w2, b2, w3, b3, *,
                              max_tile_sublanes=_MAX_TILE_SUBLANES,
                              min_pallas_batch=8192,
                              input_dtype=jnp.float32):
    """Feature-major entry point: x_fm (6, B) -> (2, B).

    Avoids the (B,6)<->(6,B) relayout copies entirely: only a pad (when needed)
    and free row-major reshapes surround the kernel.  Set
    input_dtype=jnp.bfloat16 on v6e/v7x to halve input HBM bytes (compute stays
    f32, outputs f32).
    """
    f_in, b = x_fm.shape
    assert f_in == 6
    if b < min_pallas_batch:
        return _xla_forward_fm(x_fm.astype(jnp.float32), w2, b2, w3, b3)

    nsb_needed = _cdiv(b, 128)
    tile_sublanes = _choose_tile_sublanes(nsb_needed, max_tile_sublanes)
    nsb = _round_up(nsb_needed, tile_sublanes)
    b_pad = nsb * 128

    x_p = jnp.pad(x_fm.astype(input_dtype), ((0, 0), (0, b_pad - b)))
    x_t3 = x_p.reshape(6, nsb, 128)          # free reshape (row-major view)
    out3 = _pallas_forward(x_t3, w2, b2, w3, b3, tile_sublanes=tile_sublanes)
    # Padded rows carry relu(b2)-derived values; they are sliced off here and
    # the (2, b_pad) intermediate is never exposed.
    return out3.reshape(2, b_pad)[:, :b]


def net_forward(x, w2, b2, w3, b3, *,
                max_tile_sublanes=_MAX_TILE_SUBLANES,
                min_pallas_batch=32768,
                input_dtype=jnp.float32):
    """Forward pass of Net with PyTorch semantics: x (B, 6) f32 -> (B, 2) f32.

    Weights use PyTorch-native shapes: w2=(10,6), b2=(10,), w3=(2,10), b3=(2,).
    Jit this wrapper so pad + transpose + reshape fuse into one copy; if the
    producer can supply feature-major (6, B) data, prefer
    `net_forward_feature_major` which skips the transposes entirely.
    """
    b = x.shape[0]
    if b < min_pallas_batch:
        # One fused XLA op beats pad + transpose + custom-call + transpose-back
        # until the batch is tens of thousands of rows.
        return _xla_forward(x.astype(jnp.float32), w2, b2, w3, b3)
    out_fm = net_forward_feature_major(
        x.T, w2, b2, w3, b3,
        max_tile_sublanes=max_tile_sublanes,
        min_pallas_batch=0,              # already past the crossover
        input_dtype=input_dtype)
    return out_fm.T


def init_params(key):
    """Mirrors torch.nn.init.normal_ on all weights/biases (PyTorch shapes)."""
    k1, k2, k3, k4 = jax.random.split(key, 4)
    w2 = jax.random.normal(k1, (10, 6), dtype=jnp.float32)   # fc2.weight
    b2 = jax.random.normal(k2, (10,), dtype=jnp.float32)     # fc2.bias
    w3 = jax.random.normal(k3, (2, 10), dtype=jnp.float32)   # fc3.weight
    b3 = jax.random.normal(k4, (2,), dtype=jnp.float32)      # fc3.bias
    return w2, b2, w3, b3


if __name__ == "__main__":
    key = jax.random.PRNGKey(0)
    kx, kp = jax.random.split(key)
    w2, b2, w3, b3 = init_params(kp)

    # Small demo batch; force the Pallas path (production default crossover is
    # min_pallas_batch=32768, but we want to exercise the kernel here).
    B = 2500
    x = jax.random.normal(kx, (B, 6), dtype=jnp.float32)
    ref = _xla_forward(x, w2, b2, w3, b3)

    # Row-major interface (jitted so pad/transpose/reshape fuse into one copy).
    fwd = jax.jit(lambda x, w2, b2, w3, b3:
                  net_forward(x, w2, b2, w3, b3, min_pallas_batch=1))
    out = jax.block_until_ready(fwd(x, w2, b2, w3, b3))
    assert out.shape == (B, 2), out.shape
    assert jnp.allclose(out, ref, atol=1e-4, rtol=1e-4), "row-major pallas mismatch"

    # Feature-major interface: no relayout copies around the kernel.
    fwd_fm = jax.jit(lambda xf, w2, b2, w3, b3:
                     net_forward_feature_major(xf, w2, b2, w3, b3,
                                               min_pallas_batch=1))
    out_fm = jax.block_until_ready(fwd_fm(x.T, w2, b2, w3, b3))
    assert out_fm.shape == (2, B), out_fm.shape
    assert jnp.allclose(out_fm.T, ref, atol=1e-4, rtol=1e-4), "feature-major mismatch"

    # Optional bf16 input storage (halves input HBM bytes on v6e/v7x; compute
    # stays f32 so it is also safe on v5e). Loose tolerance: bf16 input quant.
    fwd_bf = jax.jit(lambda xf, w2, b2, w3, b3:
                     net_forward_feature_major(xf, w2, b2, w3, b3,
                                               min_pallas_batch=1,
                                               input_dtype=jnp.bfloat16))
    out_bf = jax.block_until_ready(fwd_bf(x.T, w2, b2, w3, b3))
    assert out_bf.shape == (2, B), out_bf.shape
    assert jnp.allclose(out_bf.T, ref, atol=0.3, rtol=0.05), "bf16 input mismatch"

    # Tiny batch falls back to fused XLA (crossover guard).
    xs = jax.random.normal(jax.random.PRNGKey(1), (8, 6), dtype=jnp.float32)
    outs = jax.block_until_ready(net_forward(xs, w2, b2, w3, b3))
    assert jnp.allclose(outs, _xla_forward(xs, w2, b2, w3, b3),
                        atol=1e-5, rtol=1e-5), "small-batch path mismatch"

    print("KERNEL_OK")
</pallas_src>

<mosaic_0001>
module attributes {stable_mosaic.version = 11 : i64} {
  func.func @_mlp_kernel(%arg0: i32, %arg1: memref<10x6xf32, #tpu.memory_space<smem>>, %arg2: memref<10xf32, #tpu.memory_space<smem>>, %arg3: memref<2x10xf32, #tpu.memory_space<smem>>, %arg4: memref<2xf32, #tpu.memory_space<smem>>, %arg5: memref<6x32x128xf32, #tpu.memory_space<vmem>>, %arg6: memref<2x32x128xf32, #tpu.memory_space<vmem>>) attributes {dimension_semantics = [#tpu.dimension_semantics<parallel>], iteration_bounds = array<i64: 1>, scalar_prefetch = 0 : i64, scratch_operands = 0 : i64, tpu.core_type = #tpu.core_type<tc>, window_params = [{transform_indices = @transform_0, window_bounds = array<i64: 10, 6>}, {transform_indices = @transform_1, window_bounds = array<i64: 10>}, {transform_indices = @transform_2, window_bounds = array<i64: 2, 10>}, {transform_indices = @transform_3, window_bounds = array<i64: 2>}, {transform_indices = @transform_4, window_bounds = array<i64: 6, 32, 128>}, {transform_indices = @transform_5, window_bounds = array<i64: 2, 32, 128>}]} {
    %c0 = arith.constant 0 : index
    %c0_0 = arith.constant 0 : index
    %0 = memref.load %arg1[%c0, %c0_0] : memref<10x6xf32, #tpu.memory_space<smem>>
    %c0_1 = arith.constant 0 : index
    %c1 = arith.constant 1 : index
    %1 = memref.load %arg1[%c0_1, %c1] : memref<10x6xf32, #tpu.memory_space<smem>>
    %c0_2 = arith.constant 0 : index
    %c2 = arith.constant 2 : index
    %2 = memref.load %arg1[%c0_2, %c2] : memref<10x6xf32, #tpu.memory_space<smem>>
    %c0_3 = arith.constant 0 : index
    %c3 = arith.constant 3 : index
    %3 = memref.load %arg1[%c0_3, %c3] : memref<10x6xf32, #tpu.memory_space<smem>>
    %c0_4 = arith.constant 0 : index
    %c4 = arith.constant 4 : index
    %4 = memref.load %arg1[%c0_4, %c4] : memref<10x6xf32, #tpu.memory_space<smem>>
    %c0_5 = arith.constant 0 : index
    %c5 = arith.constant 5 : index
    %5 = memref.load %arg1[%c0_5, %c5] : memref<10x6xf32, #tpu.memory_space<smem>>
    %c1_6 = arith.constant 1 : index
    %c0_7 = arith.constant 0 : index
    %6 = memref.load %arg1[%c1_6, %c0_7] : memref<10x6xf32, #tpu.memory_space<smem>>
    %c1_8 = arith.constant 1 : index
    %c1_9 = arith.constant 1 : index
    %7 = memref.load %arg1[%c1_8, %c1_9] : memref<10x6xf32, #tpu.memory_space<smem>>
    %c1_10 = arith.constant 1 : index
    %c2_11 = arith.constant 2 : index
    %8 = memref.load %arg1[%c1_10, %c2_11] : memref<10x6xf32, #tpu.memory_space<smem>>
    %c1_12 = arith.constant 1 : index
    %c3_13 = arith.constant 3 : index
    %9 = memref.load %arg1[%c1_12, %c3_13] : memref<10x6xf32, #tpu.memory_space<smem>>
    %c1_14 = arith.constant 1 : index
    %c4_15 = arith.constant 4 : index
    %10 = memref.load %arg1[%c1_14, %c4_15] : memref<10x6xf32, #tpu.memory_space<smem>>
    %c1_16 = arith.constant 1 : index
    %c5_17 = arith.constant 5 : index
    %11 = memref.load %arg1[%c1_16, %c5_17] : memref<10x6xf32, #tpu.memory_space<smem>>
    %c2_18 = arith.constant 2 : index
    %c0_19 = arith.constant 0 : index
    %12 = memref.load %arg1[%c2_18, %c0_19] : memref<10x6xf32, #tpu.memory_space<smem>>
    %c2_20 = arith.constant 2 : index
    %c1_21 = arith.constant 1 : index
    %13 = memref.load %arg1[%c2_20, %c1_21] : memref<10x6xf32, #tpu.memory_space<smem>>
    %c2_22 = arith.constant 2 : index
    %c2_23 = arith.constant 2 : index
    %14 = memref.load %arg1[%c2_22, %c2_23] : memref<10x6xf32, #tpu.memory_space<smem>>
    %c2_24 = arith.constant 2 : index
    %c3_25 = arith.constant 3 : index
    %15 = memref.load %arg1[%c2_24, %c3_25] : memref<10x6xf32, #tpu.memory_space<smem>>
    %c2_26 = arith.constant 2 : index
    %c4_27 = arith.constant 4 : index
    %16 = memref.load %arg1[%c2_26, %c4_27] : memref<10x6xf32, #tpu.memory_space<smem>>
    %c2_28 = arith.constant 2 : index
    %c5_29 = arith.constant 5 : index
    %17 = memref.load %arg1[%c2_28, %c5_29] : memref<10x6xf32, #tpu.memory_space<smem>>
    %c3_30 = arith.constant 3 : index
    %c0_31 = arith.constant 0 : index
    %18 = memref.load %arg1[%c3_30, %c0_31] : memref<10x6xf32, #tpu.memory_space<smem>>
    %c3_32 = arith.constant 3 : index
    %c1_33 = arith.constant 1 : index
    %19 = memref.load %arg1[%c3_32, %c1_33] : memref<10x6xf32, #tpu.memory_space<smem>>
    %c3_34 = arith.constant 3 : index
    %c2_35 = arith.constant 2 : index
    %20 = memref.load %arg1[%c3_34, %c2_35] : memref<10x6xf32, #tpu.memory_space<smem>>
    %c3_36 = arith.constant 3 : index
    %c3_37 = arith.constant 3 : index
    %21 = memref.load %arg1[%c3_36, %c3_37] : memref<10x6xf32, #tpu.memory_space<smem>>
    %c3_38 = arith.constant 3 : index
    %c4_39 = arith.constant 4 : index
    %22 = memref.load %arg1[%c3_38, %c4_39] : memref<10x6xf32, #tpu.memory_space<smem>>
    %c3_40 = arith.constant 3 : index
    %c5_41 = arith.constant 5 : index
    %23 = memref.load %arg1[%c3_40, %c5_41] : memref<10x6xf32, #tpu.memory_space<smem>>
    %c4_42 = arith.constant 4 : index
    %c0_43 = arith.constant 0 : index
    %24 = memref.load %arg1[%c4_42, %c0_43] : memref<10x6xf32, #tpu.memory_space<smem>>
    %c4_44 = arith.constant 4 : index
    %c1_45 = arith.constant 1 : index
    %25 = memref.load %arg1[%c4_44, %c1_45] : memref<10x6xf32, #tpu.memory_space<smem>>
    %c4_46 = arith.constant 4 : index
    %c2_47 = arith.constant 2 : index
    %26 = memref.load %arg1[%c4_46, %c2_47] : memref<10x6xf32, #tpu.memory_space<smem>>
    %c4_48 = arith.constant 4 : index
    %c3_49 = arith.constant 3 : index
    %27 = memref.load %arg1[%c4_48, %c3_49] : memref<10x6xf32, #tpu.memory_space<smem>>
    %c4_50 = arith.constant 4 : index
    %c4_51 = arith.constant 4 : index
    %28 = memref.load %arg1[%c4_50, %c4_51] : memref<10x6xf32, #tpu.memory_space<smem>>
    %c4_52 = arith.constant 4 : index
    %c5_53 = arith.constant 5 : index
    %29 = memref.load %arg1[%c4_52, %c5_53] : memref<10x6xf32, #tpu.memory_space<smem>>
    %c5_54 = arith.constant 5 : index
    %c0_55 = arith.constant 0 : index
    %30 = memref.load %arg1[%c5_54, %c0_55] : memref<10x6xf32, #tpu.memory_space<smem>>
    %c5_56 = arith.constant 5 : index
    %c1_57 = arith.constant 1 : index
    %31 = memref.load %arg1[%c5_56, %c1_57] : memref<10x6xf32, #tpu.memory_space<smem>>
    %c5_58 = arith.constant 5 : index
    %c2_59 = arith.constant 2 : index
    %32 = memref.load %arg1[%c5_58, %c2_59] : memref<10x6xf32, #tpu.memory_space<smem>>
    %c5_60 = arith.constant 5 : index
    %c3_61 = arith.constant 3 : index
    %33 = memref.load %arg1[%c5_60, %c3_61] : memref<10x6xf32, #tpu.memory_space<smem>>
    %c5_62 = arith.constant 5 : index
    %c4_63 = arith.constant 4 : index
    %34 = memref.load %arg1[%c5_62, %c4_63] : memref<10x6xf32, #tpu.memory_space<smem>>
    %c5_64 = arith.constant 5 : index
    %c5_65 = arith.constant 5 : index
    %35 = memref.load %arg1[%c5_64, %c5_65] : memref<10x6xf32, #tpu.memory_space<smem>>
    %c6 = arith.constant 6 : index
    %c0_66 = arith.constant 0 : index
    %36 = memref.load %arg1[%c6, %c0_66] : memref<10x6xf32, #tpu.memory_space<smem>>
    %c6_67 = arith.constant 6 : index
    %c1_68 = arith.constant 1 : index
    %37 = memref.load %arg1[%c6_67, %c1_68] : memref<10x6xf32, #tpu.memory_space<smem>>
    %c6_69 = arith.constant 6 : index
    %c2_70 = arith.constant 2 : index
    %38 = memref.load %arg1[%c6_69, %c2_70] : memref<10x6xf32, #tpu.memory_space<smem>>
    %c6_71 = arith.constant 6 : index
    %c3_72 = arith.constant 3 : index
    %39 = memref.load %arg1[%c6_71, %c3_72] : memref<10x6xf32, #tpu.memory_space<smem>>
    %c6_73 = arith.constant 6 : index
    %c4_74 = arith.constant 4 : index
    %40 = memref.load %arg1[%c6_73, %c4_74] : memref<10x6xf32, #tpu.memory_space<smem>>
    %c6_75 = arith.constant 6 : index
    %c5_76 = arith.constant 5 : index
    %41 = memref.load %arg1[%c6_75, %c5_76] : memref<10x6xf32, #tpu.memory_space<smem>>
    %c7 = arith.constant 7 : index
    %c0_77 = arith.constant 0 : index
    %42 = memref.load %arg1[%c7, %c0_77] : memref<10x6xf32, #tpu.memory_space<smem>>
    %c7_78 = arith.constant 7 : index
    %c1_79 = arith.constant 1 : index
    %43 = memref.load %arg1[%c7_78, %c1_79] : memref<10x6xf32, #tpu.memory_space<smem>>
    %c7_80 = arith.constant 7 : index
    %c2_81 = arith.constant 2 : index
    %44 = memref.load %arg1[%c7_80, %c2_81] : memref<10x6xf32, #tpu.memory_space<smem>>
    %c7_82 = arith.constant 7 : index
    %c3_83 = arith.constant 3 : index
    %45 = memref.load %arg1[%c7_82, %c3_83] : memref<10x6xf32, #tpu.memory_space<smem>>
    %c7_84 = arith.constant 7 : index
    %c4_85 = arith.constant 4 : index
    %46 = memref.load %arg1[%c7_84, %c4_85] : memref<10x6xf32, #tpu.memory_space<smem>>
    %c7_86 = arith.constant 7 : index
    %c5_87 = arith.constant 5 : index
    %47 = memref.load %arg1[%c7_86, %c5_87] : memref<10x6xf32, #tpu.memory_space<smem>>
    %c8 = arith.constant 8 : index
    %c0_88 = arith.constant 0 : index
    %48 = memref.load %arg1[%c8, %c0_88] : memref<10x6xf32, #tpu.memory_space<smem>>
    %c8_89 = arith.constant 8 : index
    %c1_90 = arith.constant 1 : index
    %49 = memref.load %arg1[%c8_89, %c1_90] : memref<10x6xf32, #tpu.memory_space<smem>>
    %c8_91 = arith.constant 8 : index
    %c2_92 = arith.constant 2 : index
    %50 = memref.load %arg1[%c8_91, %c2_92] : memref<10x6xf32, #tpu.memory_space<smem>>
    %c8_93 = arith.constant 8 : index
    %c3_94 = arith.constant 3 : index
    %51 = memref.load %arg1[%c8_93, %c3_94] : memref<10x6xf32, #tpu.memory_space<smem>>
    %c8_95 = arith.constant 8 : index
    %c4_96 = arith.constant 4 : index
    %52 = memref.load %arg1[%c8_95, %c4_96] : memref<10x6xf32, #tpu.memory_space<smem>>
    %c8_97 = arith.constant 8 : index
    %c5_98 = arith.constant 5 : index
    %53 = memref.load %arg1[%c8_97, %c5_98] : memref<10x6xf32, #tpu.memory_space<smem>>
    %c9 = arith.constant 9 : index
    %c0_99 = arith.constant 0 : index
    %54 = memref.load %arg1[%c9, %c0_99] : memref<10x6xf32, #tpu.memory_space<smem>>
    %c9_100 = arith.constant 9 : index
    %c1_101 = arith.constant 1 : index
    %55 = memref.load %arg1[%c9_100, %c1_101] : memref<10x6xf32, #tpu.memory_space<smem>>
    %c9_102 = arith.constant 9 : index
    %c2_103 = arith.constant 2 : index
    %56 = memref.load %arg1[%c9_102, %c2_103] : memref<10x6xf32, #tpu.memory_space<smem>>
    %c9_104 = arith.constant 9 : index
    %c3_105 = arith.constant 3 : index
    %57 = memref.load %arg1[%c9_104, %c3_105] : memref<10x6xf32, #tpu.memory_space<smem>>
    %c9_106 = arith.constant 9 : index
    %c4_107 = arith.constant 4 : index
    %58 = memref.load %arg1[%c9_106, %c4_107] : memref<10x6xf32, #tpu.memory_space<smem>>
    %c9_108 = arith.constant 9 : index
    %c5_109 = arith.constant 5 : index
    %59 = memref.load %arg1[%c9_108, %c5_109] : memref<10x6xf32, #tpu.memory_space<smem>>
    %c0_110 = arith.constant 0 : index
    %60 = memref.load %arg2[%c0_110] : memref<10xf32, #tpu.memory_space<smem>>
    %c1_111 = arith.constant 1 : index
    %61 = memref.load %arg2[%c1_111] : memref<10xf32, #tpu.memory_space<smem>>
    %c2_112 = arith.constant 2 : index
    %62 = memref.load %arg2[%c2_112] : memref<10xf32, #tpu.memory_space<smem>>
    %c3_113 = arith.constant 3 : index
    %63 = memref.load %arg2[%c3_113] : memref<10xf32, #tpu.memory_space<smem>>
    %c4_114 = arith.constant 4 : index
    %64 = memref.load %arg2[%c4_114] : memref<10xf32, #tpu.memory_space<smem>>
    %c5_115 = arith.constant 5 : index
    %65 = memref.load %arg2[%c5_115] : memref<10xf32, #tpu.memory_space<smem>>
    %c6_116 = arith.constant 6 : index
    %66 = memref.load %arg2[%c6_116] : memref<10xf32, #tpu.memory_space<smem>>
    %c7_117 = arith.constant 7 : index
    %67 = memref.load %arg2[%c7_117] : memref<10xf32, #tpu.memory_space<smem>>
    %c8_118 = arith.constant 8 : index
    %68 = memref.load %arg2[%c8_118] : memref<10xf32, #tpu.memory_space<smem>>
    %c9_119 = arith.constant 9 : index
    %69 = memref.load %arg2[%c9_119] : memref<10xf32, #tpu.memory_space<smem>>
    %c0_120 = arith.constant 0 : index
    %c0_121 = arith.constant 0 : index
    %70 = memref.load %arg3[%c0_120, %c0_121] : memref<2x10xf32, #tpu.memory_space<smem>>
    %c0_122 = arith.constant 0 : index
    %c1_123 = arith.constant 1 : index
    %71 = memref.load %arg3[%c0_122, %c1_123] : memref<2x10xf32, #tpu.memory_space<smem>>
    %c0_124 = arith.constant 0 : index
    %c2_125 = arith.constant 2 : index
    %72 = memref.load %arg3[%c0_124, %c2_125] : memref<2x10xf32, #tpu.memory_space<smem>>
    %c0_126 = arith.constant 0 : index
    %c3_127 = arith.constant 3 : index
    %73 = memref.load %arg3[%c0_126, %c3_127] : memref<2x10xf32, #tpu.memory_space<smem>>
    %c0_128 = arith.constant 0 : index
    %c4_129 = arith.constant 4 : index
    %74 = memref.load %arg3[%c0_128, %c4_129] : memref<2x10xf32, #tpu.memory_space<smem>>
    %c0_130 = arith.constant 0 : index
    %c5_131 = arith.constant 5 : index
    %75 = memref.load %arg3[%c0_130, %c5_131] : memref<2x10xf32, #tpu.memory_space<smem>>
    %c0_132 = arith.constant 0 : index
    %c6_133 = arith.constant 6 : index
    %76 = memref.load %arg3[%c0_132, %c6_133] : memref<2x10xf32, #tpu.memory_space<smem>>
    %c0_134 = arith.constant 0 : index
    %c7_135 = arith.constant 7 : index
    %77 = memref.load %arg3[%c0_134, %c7_135] : memref<2x10xf32, #tpu.memory_space<smem>>
    %c0_136 = arith.constant 0 : index
    %c8_137 = arith.constant 8 : index
    %78 = memref.load %arg3[%c0_136, %c8_137] : memref<2x10xf32, #tpu.memory_space<smem>>
    %c0_138 = arith.constant 0 : index
    %c9_139 = arith.constant 9 : index
    %79 = memref.load %arg3[%c0_138, %c9_139] : memref<2x10xf32, #tpu.memory_space<smem>>
    %c1_140 = arith.constant 1 : index
    %c0_141 = arith.constant 0 : index
    %80 = memref.load %arg3[%c1_140, %c0_141] : memref<2x10xf32, #tpu.memory_space<smem>>
    %c1_142 = arith.constant 1 : index
    %c1_143 = arith.constant 1 : index
    %81 = memref.load %arg3[%c1_142, %c1_143] : memref<2x10xf32, #tpu.memory_space<smem>>
    %c1_144 = arith.constant 1 : index
    %c2_145 = arith.constant 2 : index
    %82 = memref.load %arg3[%c1_144, %c2_145] : memref<2x10xf32, #tpu.memory_space<smem>>
    %c1_146 = arith.constant 1 : index
    %c3_147 = arith.constant 3 : index
    %83 = memref.load %arg3[%c1_146, %c3_147] : memref<2x10xf32, #tpu.memory_space<smem>>
    %c1_148 = arith.constant 1 : index
    %c4_149 = arith.constant 4 : index
    %84 = memref.load %arg3[%c1_148, %c4_149] : memref<2x10xf32, #tpu.memory_space<smem>>
    %c1_150 = arith.constant 1 : index
    %c5_151 = arith.constant 5 : index
    %85 = memref.load %arg3[%c1_150, %c5_151] : memref<2x10xf32, #tpu.memory_space<smem>>
    %c1_152 = arith.constant 1 : index
    %c6_153 = arith.constant 6 : index
    %86 = memref.load %arg3[%c1_152, %c6_153] : memref<2x10xf32, #tpu.memory_space<smem>>
    %c1_154 = arith.constant 1 : index
    %c7_155 = arith.constant 7 : index
    %87 = memref.load %arg3[%c1_154, %c7_155] : memref<2x10xf32, #tpu.memory_space<smem>>
    %c1_156 = arith.constant 1 : index
    %c8_157 = arith.constant 8 : index
    %88 = memref.load %arg3[%c1_156, %c8_157] : memref<2x10xf32, #tpu.memory_space<smem>>
    %c1_158 = arith.constant 1 : index
    %c9_159 = arith.constant 9 : index
    %89 = memref.load %arg3[%c1_158, %c9_159] : memref<2x10xf32, #tpu.memory_space<smem>>
    %c0_160 = arith.constant 0 : index
    %90 = memref.load %arg4[%c0_160] : memref<2xf32, #tpu.memory_space<smem>>
    %c1_161 = arith.constant 1 : index
    %91 = memref.load %arg4[%c1_161] : memref<2xf32, #tpu.memory_space<smem>>
    %c0_i32 = arith.constant 0 : i32
    %c2_i32 = arith.constant 2 : i32
    %92 = arith.addi %c0_i32, %c2_i32 : i32
    %c1_i32 = arith.constant 1 : i32
    scf.for %arg7 = %c0_i32 to %92 step %c1_i32  : i32 {
      %c16_i32 = arith.constant 16 : i32
      %93 = arith.muli %arg7, %c16_i32 : i32
      %94 = tpu.assume_multiple %93, 16 : i32
      %c0_163 = arith.constant 0 : index
      %95 = arith.index_cast %94 : i32 to index
      %c0_164 = arith.constant 0 : index
      %96 = vector.load %arg5[%c0_163, %95, %c0_164] : memref<6x32x128xf32, #tpu.memory_space<vmem>>, vector<1x16x128xf32>
      %97 = vector.shape_cast %96 : vector<1x16x128xf32> to vector<16x128xf32>
      %c1_165 = arith.constant 1 : index
      %98 = arith.index_cast %94 : i32 to index
      %c0_166 = arith.constant 0 : index
      %99 = vector.load %arg5[%c1_165, %98, %c0_166] : memref<6x32x128xf32, #tpu.memory_space<vmem>>, vector<1x16x128xf32>
      %100 = vector.shape_cast %99 : vector<1x16x128xf32> to vector<16x128xf32>
      %c2_167 = arith.constant 2 : index
      %101 = arith.index_cast %94 : i32 to index
      %c0_168 = arith.constant 0 : index
      %102 = vector.load %arg5[%c2_167, %101, %c0_168] : memref<6x32x128xf32, #tpu.memory_space<vmem>>, vector<1x16x128xf32>
      %103 = vector.shape_cast %102 : vector<1x16x128xf32> to vector<16x128xf32>
      %c3_169 = arith.constant 3 : index
      %104 = arith.index_cast %94 : i32 to index
      %c0_170 = arith.constant 0 : index
      %105 = vector.load %arg5[%c3_169, %104, %c0_170] : memref<6x32x128xf32, #tpu.memory_space<vmem>>, vector<1x16x128xf32>
      %106 = vector.shape_cast %105 : vector<1x16x128xf32> to vector<16x128xf32>
      %c4_171 = arith.constant 4 : index
      %107 = arith.index_cast %94 : i32 to index
      %c0_172 = arith.constant 0 : index
      %108 = vector.load %arg5[%c4_171, %107, %c0_172] : memref<6x32x128xf32, #tpu.memory_space<vmem>>, vector<1x16x128xf32>
      %109 = vector.shape_cast %108 : vector<1x16x128xf32> to vector<16x128xf32>
      %c5_173 = arith.constant 5 : index
      %110 = arith.index_cast %94 : i32 to index
      %c0_174 = arith.constant 0 : index
      %111 = vector.load %arg5[%c5_173, %110, %c0_174] : memref<6x32x128xf32, #tpu.memory_space<vmem>>, vector<1x16x128xf32>
      %112 = vector.shape_cast %111 : vector<1x16x128xf32> to vector<16x128xf32>
      %cst = arith.constant 0.000000e+00 : f32
      %113 = vector.broadcast %cst : f32 to vector<16x128xf32>
      %cst_175 = arith.constant 0.000000e+00 : f32
      %114 = vector.broadcast %cst_175 : f32 to vector<16x128xf32>
      %115 = vector.broadcast %0 : f32 to vector<16x128xf32>
      %116 = arith.mulf %97, %115 : vector<16x128xf32>
      %117 = vector.broadcast %1 : f32 to vector<16x128xf32>
      %118 = arith.mulf %100, %117 : vector<16x128xf32>
      %119 = arith.addf %116, %118 : vector<16x128xf32>
      %120 = vector.broadcast %2 : f32 to vector<16x128xf32>
      %121 = arith.mulf %103, %120 : vector<16x128xf32>
      %122 = arith.addf %119, %121 : vector<16x128xf32>
      %123 = vector.broadcast %3 : f32 to vector<16x128xf32>
      %124 = arith.mulf %106, %123 : vector<16x128xf32>
      %125 = arith.addf %122, %124 : vector<16x128xf32>
      %126 = vector.broadcast %4 : f32 to vector<16x128xf32>
      %127 = arith.mulf %109, %126 : vector<16x128xf32>
      %128 = arith.addf %125, %127 : vector<16x128xf32>
      %129 = vector.broadcast %5 : f32 to vector<16x128xf32>
      %130 = arith.mulf %112, %129 : vector<16x128xf32>
      %131 = arith.addf %128, %130 : vector<16x128xf32>
      %132 = vector.broadcast %60 : f32 to vector<16x128xf32>
      %133 = arith.addf %131, %132 : vector<16x128xf32>
      %cst_176 = arith.constant 0.000000e+00 : f32
      %134 = vector.broadcast %cst_176 : f32 to vector<16x128xf32>
      %135 = arith.maximumf %133, %134 : vector<16x128xf32>
      %136 = vector.broadcast %70 : f32 to vector<16x128xf32>
      %137 = arith.mulf %135, %136 : vector<16x128xf32>
      %138 = arith.addf %113, %137 : vector<16x128xf32>
      %139 = vector.broadcast %80 : f32 to vector<16x128xf32>
      %140 = arith.mulf %135, %139 : vector<16x128xf32>
      %141 = arith.addf %114, %140 : vector<16x128xf32>
      %142 = vector.broadcast %6 : f32 to vector<16x128xf32>
      %143 = arith.mulf %97, %142 : vector<16x128xf32>
      %144 = vector.broadcast %7 : f32 to vector<16x128xf32>
      %145 = arith.mulf %100, %144 : vector<16x128xf32>
      %146 = arith.addf %143, %145 : vector<16x128xf32>
      %147 = vector.broadcast %8 : f32 to vector<16x128xf32>
      %148 = arith.mulf %103, %147 : vector<16x128xf32>
      %149 = arith.addf %146, %148 : vector<16x128xf32>
      %150 = vector.broadcast %9 : f32 to vector<16x128xf32>
      %151 = arith.mulf %106, %150 : vector<16x128xf32>
      %152 = arith.addf %149, %151 : vector<16x128xf32>
      %153 = vector.broadcast %10 : f32 to vector<16x128xf32>
      %154 = arith.mulf %109, %153 : vector<16x128xf32>
      %155 = arith.addf %152, %154 : vector<16x128xf32>
      %156 = vector.broadcast %11 : f32 to vector<16x128xf32>
      %157 = arith.mulf %112, %156 : vector<16x128xf32>
      %158 = arith.addf %155, %157 : vector<16x128xf32>
      %159 = vector.broadcast %61 : f32 to vector<16x128xf32>
      %160 = arith.addf %158, %159 : vector<16x128xf32>
      %cst_177 = arith.constant 0.000000e+00 : f32
      %161 = vector.broadcast %cst_177 : f32 to vector<16x128xf32>
      %162 = arith.maximumf %160, %161 : vector<16x128xf32>
      %163 = vector.broadcast %71 : f32 to vector<16x128xf32>
      %164 = arith.mulf %162, %163 : vector<16x128xf32>
      %165 = arith.addf %138, %164 : vector<16x128xf32>
      %166 = vector.broadcast %81 : f32 to vector<16x128xf32>
      %167 = arith.mulf %162, %166 : vector<16x128xf32>
      %168 = arith.addf %141, %167 : vector<16x128xf32>
      %169 = vector.broadcast %12 : f32 to vector<16x128xf32>
      %170 = arith.mulf %97, %169 : vector<16x128xf32>
      %171 = vector.broadcast %13 : f32 to vector<16x128xf32>
      %172 = arith.mulf %100, %171 : vector<16x128xf32>
      %173 = arith.addf %170, %172 : vector<16x128xf32>
      %174 = vector.broadcast %14 : f32 to vector<16x128xf32>
      %175 = arith.mulf %103, %174 : vector<16x128xf32>
      %176 = arith.addf %173, %175 : vector<16x128xf32>
      %177 = vector.broadcast %15 : f32 to vector<16x128xf32>
      %178 = arith.mulf %106, %177 : vector<16x128xf32>
      %179 = arith.addf %176, %178 : vector<16x128xf32>
      %180 = vector.broadcast %16 : f32 to vector<16x128xf32>
      %181 = arith.mulf %109, %180 : vector<16x128xf32>
      %182 = arith.addf %179, %181 : vector<16x128xf32>
      %183 = vector.broadcast %17 : f32 to vector<16x128xf32>
      %184 = arith.mulf %112, %183 : vector<16x128xf32>
      %185 = arith.addf %182, %184 : vector<16x128xf32>
      %186 = vector.broadcast %62 : f32 to vector<16x128xf32>
      %187 = arith.addf %185, %186 : vector<16x128xf32>
      %cst_178 = arith.constant 0.000000e+00 : f32
      %188 = vector.broadcast %cst_178 : f32 to vector<16x128xf32>
      %189 = arith.maximumf %187, %188 : vector<16x128xf32>
      %190 = vector.broadcast %72 : f32 to vector<16x128xf32>
      %191 = arith.mulf %189, %190 : vector<16x128xf32>
      %192 = arith.addf %165, %191 : vector<16x128xf32>
      %193 = vector.broadcast %82 : f32 to vector<16x128xf32>
      %194 = arith.mulf %189, %193 : vector<16x128xf32>
      %195 = arith.addf %168, %194 : vector<16x128xf32>
      %196 = vector.broadcast %18 : f32 to vector<16x128xf32>
      %197 = arith.mulf %97, %196 : vector<16x128xf32>
      %198 = vector.broadcast %19 : f32 to vector<16x128xf32>
      %199 = arith.mulf %100, %198 : vector<16x128xf32>
      %200 = arith.addf %197, %199 : vector<16x128xf32>
      %201 = vector.broadcast %20 : f32 to vector<16x128xf32>
      %202 = arith.mulf %103, %201 : vector<16x128xf32>
      %203 = arith.addf %200, %202 : vector<16x128xf32>
      %204 = vector.broadcast %21 : f32 to vector<16x128xf32>
      %205 = arith.mulf %106, %204 : vector<16x128xf32>
      %206 = arith.addf %203, %205 : vector<16x128xf32>
      %207 = vector.broadcast %22 : f32 to vector<16x128xf32>
      %208 = arith.mulf %109, %207 : vector<16x128xf32>
      %209 = arith.addf %206, %208 : vector<16x128xf32>
      %210 = vector.broadcast %23 : f32 to vector<16x128xf32>
      %211 = arith.mulf %112, %210 : vector<16x128xf32>
      %212 = arith.addf %209, %211 : vector<16x128xf32>
      %213 = vector.broadcast %63 : f32 to vector<16x128xf32>
      %214 = arith.addf %212, %213 : vector<16x128xf32>
      %cst_179 = arith.constant 0.000000e+00 : f32
      %215 = vector.broadcast %cst_179 : f32 to vector<16x128xf32>
      %216 = arith.maximumf %214, %215 : vector<16x128xf32>
      %217 = vector.broadcast %73 : f32 to vector<16x128xf32>
      %218 = arith.mulf %216, %217 : vector<16x128xf32>
      %219 = arith.addf %192, %218 : vector<16x128xf32>
      %220 = vector.broadcast %83 : f32 to vector<16x128xf32>
      %221 = arith.mulf %216, %220 : vector<16x128xf32>
      %222 = arith.addf %195, %221 : vector<16x128xf32>
      %223 = vector.broadcast %24 : f32 to vector<16x128xf32>
      %224 = arith.mulf %97, %223 : vector<16x128xf32>
      %225 = vector.broadcast %25 : f32 to vector<16x128xf32>
      %226 = arith.mulf %100, %225 : vector<16x128xf32>
      %227 = arith.addf %224, %226 : vector<16x128xf32>
      %228 = vector.broadcast %26 : f32 to vector<16x128xf32>
      %229 = arith.mulf %103, %228 : vector<16x128xf32>
      %230 = arith.addf %227, %229 : vector<16x128xf32>
      %231 = vector.broadcast %27 : f32 to vector<16x128xf32>
      %232 = arith.mulf %106, %231 : vector<16x128xf32>
      %233 = arith.addf %230, %232 : vector<16x128xf32>
      %234 = vector.broadcast %28 : f32 to vector<16x128xf32>
      %235 = arith.mulf %109, %234 : vector<16x128xf32>
      %236 = arith.addf %233, %235 : vector<16x128xf32>
      %237 = vector.broadcast %29 : f32 to vector<16x128xf32>
      %238 = arith.mulf %112, %237 : vector<16x128xf32>
      %239 = arith.addf %236, %238 : vector<16x128xf32>
      %240 = vector.broadcast %64 : f32 to vector<16x128xf32>
      %241 = arith.addf %239, %240 : vector<16x128xf32>
      %cst_180 = arith.constant 0.000000e+00 : f32
      %242 = vector.broadcast %cst_180 : f32 to vector<16x128xf32>
      %243 = arith.maximumf %241, %242 : vector<16x128xf32>
      %244 = vector.broadcast %74 : f32 to vector<16x128xf32>
      %245 = arith.mulf %243, %244 : vector<16x128xf32>
      %246 = arith.addf %219, %245 : vector<16x128xf32>
      %247 = vector.broadcast %84 : f32 to vector<16x128xf32>
      %248 = arith.mulf %243, %247 : vector<16x128xf32>
      %249 = arith.addf %222, %248 : vector<16x128xf32>
      %250 = vector.broadcast %30 : f32 to vector<16x128xf32>
      %251 = arith.mulf %97, %250 : vector<16x128xf32>
      %252 = vector.broadcast %31 : f32 to vector<16x128xf32>
      %253 = arith.mulf %100, %252 : vector<16x128xf32>
      %254 = arith.addf %251, %253 : vector<16x128xf32>
      %255 = vector.broadcast %32 : f32 to vector<16x128xf32>
      %256 = arith.mulf %103, %255 : vector<16x128xf32>
      %257 = arith.addf %254, %256 : vector<16x128xf32>
      %258 = vector.broadcast %33 : f32 to vector<16x128xf32>
      %259 = arith.mulf %106, %258 : vector<16x128xf32>
      %260 = arith.addf %257, %259 : vector<16x128xf32>
      %261 = vector.broadcast %34 : f32 to vector<16x128xf32>
      %262 = arith.mulf %109, %261 : vector<16x128xf32>
      %263 = arith.addf %260, %262 : vector<16x128xf32>
      %264 = vector.broadcast %35 : f32 to vector<16x128xf32>
      %265 = arith.mulf %112, %264 : vector<16x128xf32>
      %266 = arith.addf %263, %265 : vector<16x128xf32>
      %267 = vector.broadcast %65 : f32 to vector<16x128xf32>
      %268 = arith.addf %266, %267 : vector<16x128xf32>
      %cst_181 = arith.constant 0.000000e+00 : f32
      %269 = vector.broadcast %cst_181 : f32 to vector<16x128xf32>
      %270 = arith.maximumf %268, %269 : vector<16x128xf32>
      %271 = vector.broadcast %75 : f32 to vector<16x128xf32>
      %272 = arith.mulf %270, %271 : vector<16x128xf32>
      %273 = arith.addf %246, %272 : vector<16x128xf32>
      %274 = vector.broadcast %85 : f32 to vector<16x128xf32>
      %275 = arith.mulf %270, %274 : vector<16x128xf32>
      %276 = arith.addf %249, %275 : vector<16x128xf32>
      %277 = vector.broadcast %36 : f32 to vector<16x128xf32>
      %278 = arith.mulf %97, %277 : vector<16x128xf32>
      %279 = vector.broadcast %37 : f32 to vector<16x128xf32>
      %280 = arith.mulf %100, %279 : vector<16x128xf32>
      %281 = arith.addf %278, %280 : vector<16x128xf32>
      %282 = vector.broadcast %38 : f32 to vector<16x128xf32>
      %283 = arith.mulf %103, %282 : vector<16x128xf32>
      %284 = arith.addf %281, %283 : vector<16x128xf32>
      %285 = vector.broadcast %39 : f32 to vector<16x128xf32>
      %286 = arith.mulf %106, %285 : vector<16x128xf32>
      %287 = arith.addf %284, %286 : vector<16x128xf32>
      %288 = vector.broadcast %40 : f32 to vector<16x128xf32>
      %289 = arith.mulf %109, %288 : vector<16x128xf32>
      %290 = arith.addf %287, %289 : vector<16x128xf32>
      %291 = vector.broadcast %41 : f32 to vector<16x128xf32>
      %292 = arith.mulf %112, %291 : vector<16x128xf32>
      %293 = arith.addf %290, %292 : vector<16x128xf32>
      %294 = vector.broadcast %66 : f32 to vector<16x128xf32>
      %295 = arith.addf %293, %294 : vector<16x128xf32>
      %cst_182 = arith.constant 0.000000e+00 : f32
      %296 = vector.broadcast %cst_182 : f32 to vector<16x128xf32>
      %297 = arith.maximumf %295, %296 : vector<16x128xf32>
      %298 = vector.broadcast %76 : f32 to vector<16x128xf32>
      %299 = arith.mulf %297, %298 : vector<16x128xf32>
      %300 = arith.addf %273, %299 : vector<16x128xf32>
      %301 = vector.broadcast %86 : f32 to vector<16x128xf32>
      %302 = arith.mulf %297, %301 : vector<16x128xf32>
      %303 = arith.addf %276, %302 : vector<16x128xf32>
      %304 = vector.broadcast %42 : f32 to vector<16x128xf32>
      %305 = arith.mulf %97, %304 : vector<16x128xf32>
      %306 = vector.broadcast %43 : f32 to vector<16x128xf32>
      %307 = arith.mulf %100, %306 : vector<16x128xf32>
      %308 = arith.addf %305, %307 : vector<16x128xf32>
      %309 = vector.broadcast %44 : f32 to vector<16x128xf32>
      %310 = arith.mulf %103, %309 : vector<16x128xf32>
      %311 = arith.addf %308, %310 : vector<16x128xf32>
      %312 = vector.broadcast %45 : f32 to vector<16x128xf32>
      %313 = arith.mulf %106, %312 : vector<16x128xf32>
      %314 = arith.addf %311, %313 : vector<16x128xf32>
      %315 = vector.broadcast %46 : f32 to vector<16x128xf32>
      %316 = arith.mulf %109, %315 : vector<16x128xf32>
      %317 = arith.addf %314, %316 : vector<16x128xf32>
      %318 = vector.broadcast %47 : f32 to vector<16x128xf32>
      %319 = arith.mulf %112, %318 : vector<16x128xf32>
      %320 = arith.addf %317, %319 : vector<16x128xf32>
      %321 = vector.broadcast %67 : f32 to vector<16x128xf32>
      %322 = arith.addf %320, %321 : vector<16x128xf32>
      %cst_183 = arith.constant 0.000000e+00 : f32
      %323 = vector.broadcast %cst_183 : f32 to vector<16x128xf32>
      %324 = arith.maximumf %322, %323 : vector<16x128xf32>
      %325 = vector.broadcast %77 : f32 to vector<16x128xf32>
      %326 = arith.mulf %324, %325 : vector<16x128xf32>
      %327 = arith.addf %300, %326 : vector<16x128xf32>
      %328 = vector.broadcast %87 : f32 to vector<16x128xf32>
      %329 = arith.mulf %324, %328 : vector<16x128xf32>
      %330 = arith.addf %303, %329 : vector<16x128xf32>
      %331 = vector.broadcast %48 : f32 to vector<16x128xf32>
      %332 = arith.mulf %97, %331 : vector<16x128xf32>
      %333 = vector.broadcast %49 : f32 to vector<16x128xf32>
      %334 = arith.mulf %100, %333 : vector<16x128xf32>
      %335 = arith.addf %332, %334 : vector<16x128xf32>
      %336 = vector.broadcast %50 : f32 to vector<16x128xf32>
      %337 = arith.mulf %103, %336 : vector<16x128xf32>
      %338 = arith.addf %335, %337 : vector<16x128xf32>
      %339 = vector.broadcast %51 : f32 to vector<16x128xf32>
      %340 = arith.mulf %106, %339 : vector<16x128xf32>
      %341 = arith.addf %338, %340 : vector<16x128xf32>
      %342 = vector.broadcast %52 : f32 to vector<16x128xf32>
      %343 = arith.mulf %109, %342 : vector<16x128xf32>
      %344 = arith.addf %341, %343 : vector<16x128xf32>
      %345 = vector.broadcast %53 : f32 to vector<16x128xf32>
      %346 = arith.mulf %112, %345 : vector<16x128xf32>
      %347 = arith.addf %344, %346 : vector<16x128xf32>
      %348 = vector.broadcast %68 : f32 to vector<16x128xf32>
      %349 = arith.addf %347, %348 : vector<16x128xf32>
      %cst_184 = arith.constant 0.000000e+00 : f32
      %350 = vector.broadcast %cst_184 : f32 to vector<16x128xf32>
      %351 = arith.maximumf %349, %350 : vector<16x128xf32>
      %352 = vector.broadcast %78 : f32 to vector<16x128xf32>
      %353 = arith.mulf %351, %352 : vector<16x128xf32>
      %354 = arith.addf %327, %353 : vector<16x128xf32>
      %355 = vector.broadcast %88 : f32 to vector<16x128xf32>
      %356 = arith.mulf %351, %355 : vector<16x128xf32>
      %357 = arith.addf %330, %356 : vector<16x128xf32>
      %358 = vector.broadcast %54 : f32 to vector<16x128xf32>
      %359 = arith.mulf %97, %358 : vector<16x128xf32>
      %360 = vector.broadcast %55 : f32 to vector<16x128xf32>
      %361 = arith.mulf %100, %360 : vector<16x128xf32>
      %362 = arith.addf %359, %361 : vector<16x128xf32>
      %363 = vector.broadcast %56 : f32 to vector<16x128xf32>
      %364 = arith.mulf %103, %363 : vector<16x128xf32>
      %365 = arith.addf %362, %364 : vector<16x128xf32>
      %366 = vector.broadcast %57 : f32 to vector<16x128xf32>
      %367 = arith.mulf %106, %366 : vector<16x128xf32>
      %368 = arith.addf %365, %367 : vector<16x128xf32>
      %369 = vector.broadcast %58 : f32 to vector<16x128xf32>
      %370 = arith.mulf %109, %369 : vector<16x128xf32>
      %371 = arith.addf %368, %370 : vector<16x128xf32>
      %372 = vector.broadcast %59 : f32 to vector<16x128xf32>
      %373 = arith.mulf %112, %372 : vector<16x128xf32>
      %374 = arith.addf %371, %373 : vector<16x128xf32>
      %375 = vector.broadcast %69 : f32 to vector<16x128xf32>
      %376 = arith.addf %374, %375 : vector<16x128xf32>
      %cst_185 = arith.constant 0.000000e+00 : f32
      %377 = vector.broadcast %cst_185 : f32 to vector<16x128xf32>
      %378 = arith.maximumf %376, %377 : vector<16x128xf32>
      %379 = vector.broadcast %79 : f32 to vector<16x128xf32>
      %380 = arith.mulf %378, %379 : vector<16x128xf32>
      %381 = arith.addf %354, %380 : vector<16x128xf32>
      %382 = vector.broadcast %89 : f32 to vector<16x128xf32>
      %383 = arith.mulf %378, %382 : vector<16x128xf32>
      %384 = arith.addf %357, %383 : vector<16x128xf32>
      %385 = vector.broadcast %90 : f32 to vector<16x128xf32>
      %386 = arith.addf %381, %385 : vector<16x128xf32>
      %c0_186 = arith.constant 0 : index
      %387 = arith.index_cast %94 : i32 to index
      %c0_187 = arith.constant 0 : index
      %388 = vector.load %arg6[%c0_186, %387, %c0_187] : memref<2x32x128xf32, #tpu.memory_space<vmem>>, vector<1x16x128xf32>
      %389 = vector.shape_cast %388 : vector<1x16x128xf32> to vector<16x128xf32>
      %390 = vector.shape_cast %386 : vector<16x128xf32> to vector<1x16x128xf32>
      tpu.vector_store %arg6[%c0_186, %387, %c0_187], %390 {strides = array<i32>} : memref<2x32x128xf32, #tpu.memory_space<vmem>>, vector<1x16x128xf32>,
      %391 = vector.broadcast %91 : f32 to vector<16x128xf32>
      %392 = arith.addf %384, %391 : vector<16x128xf32>
      %c1_188 = arith.constant 1 : index
      %393 = arith.index_cast %94 : i32 to index
      %c0_189 = arith.constant 0 : index
      %394 = vector.load %arg6[%c1_188, %393, %c0_189] : memref<2x32x128xf32, #tpu.memory_space<vmem>>, vector<1x16x128xf32>
      %395 = vector.shape_cast %394 : vector<1x16x128xf32> to vector<16x128xf32>
      %396 = vector.shape_cast %392 : vector<16x128xf32> to vector<1x16x128xf32>
      tpu.vector_store %arg6[%c1_188, %393, %c0_189], %396 {strides = array<i32>} : memref<2x32x128xf32, #tpu.memory_space<vmem>>, vector<1x16x128xf32>,
    }
    %c2_i32_162 = arith.constant 2 : i32
    return
  }
  func.func @transform_0(%arg0: i32) -> (i32, i32) {
    %c0_i32 = arith.constant 0 : i32
    %c0_i32_0 = arith.constant 0 : i32
    %c0_i32_1 = arith.constant 0 : i32
    return %c0_i32, %c0_i32_0 : i32, i32
  }
  func.func @transform_1(%arg0: i32) -> i32 {
    %c0_i32 = arith.constant 0 : i32
    %c0_i32_0 = arith.constant 0 : i32
    return %c0_i32 : i32
  }
  func.func @transform_2(%arg0: i32) -> (i32, i32) {
    %c0_i32 = arith.constant 0 : i32
    %c0_i32_0 = arith.constant 0 : i32
    %c0_i32_1 = arith.constant 0 : i32
    return %c0_i32, %c0_i32_0 : i32, i32
  }
  func.func @transform_3(%arg0: i32) -> i32 {
    %c0_i32 = arith.constant 0 : i32
    %c0_i32_0 = arith.constant 0 : i32
    return %c0_i32 : i32
  }
  func.func @transform_4(%arg0: i32) -> (i32, i32, i32) {
    %c0_i32 = arith.constant 0 : i32
    %c0_i32_0 = arith.constant 0 : i32
    %c0_i32_1 = arith.constant 0 : i32
    return %c0_i32, %arg0, %c0_i32_0 : i32, i32, i32
  }
  func.func @transform_5(%arg0: i32) -> (i32, i32, i32) {
    %c0_i32 = arith.constant 0 : i32
    %c0_i32_0 = arith.constant 0 : i32
    %c0_i32_1 = arith.constant 0 : i32
    return %c0_i32, %arg0, %c0_i32_0 : i32, i32, i32
  }
}

</mosaic_0001>

<llo_original>
// kernel: _lambda_.1
$region0: #{_lambda_.1}
  #allocation0 [shape = 'u32[]', space=smem, size = 0x4, offset = 0x4, fixed_abs, tag = 'smem constant byte address 0x4 - core index']
  #allocation1 [shape = 'u32[72,128]{1,0:T(1,128)}', space=vmem, size = 0x9000, scoped, tag = 'internal scratch']
  %s0 = inlined_call_operand.vmem [shape: f32[10,6], index: 0, kind: input, shape index: {}]
  %s1 = inlined_call_operand.vmem [shape: f32[10], index: 1, kind: input, shape index: {}]
  %s2 = inlined_call_operand.vmem [shape: f32[2,10], index: 2, kind: input, shape index: {}]
  %s3 = inlined_call_operand.vmem [shape: f32[2], index: 3, kind: input, shape index: {}]
  %s4 = inlined_call_operand.vmem [shape: f32[6,32,128], index: 4, kind: input, shape index: {}]
  %s5 = inlined_call_operand.vmem [shape: f32[2,32,128], index: 5, kind: output, shape index: {}]
  %s6 = sld [smem:[#allocation0]]
  $region53: #{_lambda_.1} parent=0
    _
  %s8 = ssub.s32 1, %s6
  %s9 = scalar_select 0, %s8, %s6
  $region1: #{_lambda_.1} parent=0
    #allocation2 [shape = 'u8[8192]{0}', space=smem, size = 0x2000, scoped, tag = 'input window, operand 0, single buffered']
    #allocation3 [shape = 's32[1]{0}', space=sflag, size = 0x4, scoped, tag = 'scoped memory for _lambda_.1']
    #allocation4 [shape = 'u8[512]{0}', space=smem, size = 0x200, scoped, tag = 'input window, operand 1, single buffered']
    #allocation5 [shape = 's32[1]{0}', space=sflag, size = 0x4, scoped, tag = 'scoped memory for _lambda_.1']
    #allocation6 [shape = 'u8[1024]{0}', space=smem, size = 0x400, scoped, tag = 'input window, operand 2, single buffered']
    #allocation7 [shape = 'u8[512]{0}', space=smem, size = 0x200, scoped, tag = 'input window, operand 3, single buffered']
    #allocation8 [shape = 's32[1]{0}', space=sflag, size = 0x4, scoped, tag = 'scoped memory for _lambda_.1']
    %10 = vsyncpa [#allocation3], 0
    %11 = vsyncpa [#allocation5], 0
    %12 = vsyncpa [#allocation8], 0
    // Predicated region
    $region2: #{_lambda_.1} parent=1 // pred_check
      _
    $region3: #{_lambda_.1} parent=1 // pred_check_branch
      %14 = sbr.rel (0) target = $region5
    $region4: #{_lambda_.1} parent=1 // pred_region
      %16 = vsyncadd [#allocation3], 0
      %s17 = sshll.u32 %s0, 4
      %s18 = int_to_ptr.vmem [resolvable:$true] %s17
      %23 = dma.vmem_to_smem %s18, 256, [#allocation2], [#allocation3], 128, 128, 8
    $region5: #{_lambda_.1} parent=1 // pred_fallthru
      _
    // Predicated region
    $region6: #{_lambda_.1} parent=1 // pred_check
      _
    $region7: #{_lambda_.1} parent=1 // pred_check_branch
      %25 = sbr.rel (0) target = $region9
    $region8: #{_lambda_.1} parent=1 // pred_region
      %27 = vsyncadd [#allocation5], 0
      %s29 = sshll.u32 %s1, 4
      %s30 = int_to_ptr.vmem [resolvable:$true] %s29
      %32 = dma.vmem_to_smem %s30, 16, [#allocation4], [#allocation5]
    $region9: #{_lambda_.1} parent=1 // pred_fallthru
      _
    // Predicated region
    $region10: #{_lambda_.1} parent=1 // pred_check
      _
    $region11: #{_lambda_.1} parent=1 // pred_check_branch
      %34 = sbr.rel (0) target = $region13
    $region12: #{_lambda_.1} parent=1 // pred_region
      %36 = vsyncadd [#allocation5], 0
      %s38 = sshll.u32 %s2, 4
      %s39 = int_to_ptr.vmem [resolvable:$true] %s38
      %41 = dma.vmem_to_smem %s39, 32, [#allocation6], [#allocation5]
    $region13: #{_lambda_.1} parent=1 // pred_fallthru
      _
    // Predicated region
    $region14: #{_lambda_.1} parent=1 // pred_check
      _
    $region15: #{_lambda_.1} parent=1 // pred_check_branch
      %43 = sbr.rel (0) target = $region17
    $region16: #{_lambda_.1} parent=1 // pred_region
      %45 = vsyncadd [#allocation8], 0
      %s47 = sshll.u32 %s3, 4
      %s48 = int_to_ptr.vmem [resolvable:$true] %s47
      %50 = dma.vmem_to_smem %s48, 16, [#allocation7], [#allocation8]
    $region17: #{_lambda_.1} parent=1 // pred_fallthru
      _
    // Predicated region
    $region18: #{_lambda_.1} parent=1 // pred_check
      _
    $region19: #{_lambda_.1} parent=1 // pred_check_branch
      %52 = sbr.rel (0) target = $region21
    $region20: #{_lambda_.1} parent=1 // pred_region
      _
    $region21: #{_lambda_.1} parent=1 // pred_fallthru
      _
    // Predicated region
    $region22: #{_lambda_.1} parent=1 // pred_check
      _
    $region23: #{_lambda_.1} parent=1 // pred_check_branch
      %54 = sbr.rel (0) target = $region25
    $region24: #{_lambda_.1} parent=1 // pred_region
      %56 = dma.done [#allocation3], 256
    $region25: #{_lambda_.1} parent=1 // pred_fallthru
      _
    // Predicated region
    $region26: #{_lambda_.1} parent=1 // pred_check
      _
    $region27: #{_lambda_.1} parent=1 // pred_check_branch
      %58 = sbr.rel (0) target = $region29
    $region28: #{_lambda_.1} parent=1 // pred_region
      %60 = dma.done [#allocation5], 16
    $region29: #{_lambda_.1} parent=1 // pred_fallthru
      _
    // Predicated region
    $region30: #{_lambda_.1} parent=1 // pred_check
      _
    $region31: #{_lambda_.1} parent=1 // pred_check_branch
      %62 = sbr.rel (0) target = $region33
    $region32: #{_lambda_.1} parent=1 // pred_region
      %64 = dma.done [#allocation5], 32
    $region33: #{_lambda_.1} parent=1 // pred_fallthru
      _
    // Predicated region
    $region34: #{_lambda_.1} parent=1 // pred_check
      _
    $region35: #{_lambda_.1} parent=1 // pred_check_branch
      %66 = sbr.rel (0) target = $region37
    $region36: #{_lambda_.1} parent=1 // pred_region
      %68 = dma.done [#allocation8], 16
    $region37: #{_lambda_.1} parent=1 // pred_fallthru
      _
    %69 = sfence
    %s70 = sld [smem:[#allocation2]]
    %s71 = sld [smem:[#allocation2 + $0x1]]
    %s72 = sld [smem:[#allocation2 + $0x2]]
    %s73 = sld [smem:[#allocation2 + $0x3]]
    %s74 = sld [smem:[#allocation2 + $0x4]]
    %s75 = sld [smem:[#allocation2 + $0x5]]
    %s76 = sld [smem:[#allocation2 + $0x80]]
    %s77 = sld [smem:[#allocation2 + $0x81]]
    %s78 = sld [smem:[#allocation2 + $0x82]]
    %s79 = sld [smem:[#allocation2 + $0x83]]
    %s80 = sld [smem:[#allocation2 + $0x84]]
    %s81 = sld [smem:[#allocation2 + $0x85]]
    %s82 = sld [smem:[#allocation2 + $0x100]]
    %s83 = sld [smem:[#allocation2 + $0x101]]
    %s84 = sld [smem:[#allocation2 + $0x102]]
    %s85 = sld [smem:[#allocation2 + $0x103]]
    %s86 = sld [smem:[#allocation2 + $0x104]]
    %s87 = sld [smem:[#allocation2 + $0x105]]
    %s88 = sld [smem:[#allocation2 + $0x180]]
    %s89 = sld [smem:[#allocation2 + $0x181]]
    %s90 = sld [smem:[#allocation2 + $0x182]]
    %s91 = sld [smem:[#allocation2 + $0x183]]
    %s92 = sld [smem:[#allocation2 + $0x184]]
    %s93 = sld [smem:[#allocation2 + $0x185]]
    %s94 = sld [smem:[#allocation2 + $0x200]]
    %s95 = sld [smem:[#allocation2 + $0x201]]
    %s96 = sld [smem:[#allocation2 + $0x202]]
    %s97 = sld [smem:[#allocation2 + $0x203]]
    %s98 = sld [smem:[#allocation2 + $0x204]]
    %s99 = sld [smem:[#allocation2 + $0x205]]
    %s100 = sld [smem:[#allocation2 + $0x280]]
    %s101 = sld [smem:[#allocation2 + $0x281]]
    %s102 = sld [smem:[#allocation2 + $0x282]]
    %s103 = sld [smem:[#allocation2 + $0x283]]
    %s104 = sld [smem:[#allocation2 + $0x284]]
    %s105 = sld [smem:[#allocation2 + $0x285]]
    %s106 = sld [smem:[#allocation2 + $0x300]]
    %s107 = sld [smem:[#allocation2 + $0x301]]
    %s108 = sld [smem:[#allocation2 + $0x302]]
    %s109 = sld [smem:[#allocation2 + $0x303]]
    %s110 = sld [smem:[#allocation2 + $0x304]]
    %s111 = sld [smem:[#allocation2 + $0x305]]
    %s112 = sld [smem:[#allocation2 + $0x380]]
    %s113 = sld [smem:[#allocation2 + $0x381]]
    %s114 = sld [smem:[#allocation2 + $0x382]]
    %s115 = sld [smem:[#allocation2 + $0x383]]
    %s116 = sld [smem:[#allocation2 + $0x384]]
    %s117 = sld [smem:[#allocation2 + $0x385]]
    %s118 = sld [smem:[#allocation2 + $0x400]]
    %s119 = sld [smem:[#allocation2 + $0x401]]
    %s120 = sld [smem:[#allocation2 + $0x402]]
    %s121 = sld [smem:[#allocation2 + $0x403]]
    %s122 = sld [smem:[#allocation2 + $0x404]]
    %s123 = sld [smem:[#allocation2 + $0x405]]
    %s124 = sld [smem:[#allocation2 + $0x480]]
    %s125 = sld [smem:[#allocation2 + $0x481]]
    %s126 = sld [smem:[#allocation2 + $0x482]]
    %s127 = sld [smem:[#allocation2 + $0x483]]
    %s128 = sld [smem:[#allocation2 + $0x484]]
    %s129 = sld [smem:[#allocation2 + $0x485]]
    %s130 = sld [smem:[#allocation4]]
    %s131 = sld [smem:[#allocation4 + $0x1]]
    %s132 = sld [smem:[#allocation4 + $0x2]]
    %s133 = sld [smem:[#allocation4 + $0x3]]
    %s134 = sld [smem:[#allocation4 + $0x4]]
    %s135 = sld [smem:[#allocation4 + $0x5]]
    %s136 = sld [smem:[#allocation4 + $0x6]]
    %s137 = sld [smem:[#allocation4 + $0x7]]
    %s138 = sld [smem:[#allocation4 + $0x8]]
    %s139 = sld [smem:[#allocation4 + $0x9]]
    %s140 = sld [smem:[#allocation6]]
    %s141 = sld [smem:[#allocation6 + $0x1]]
    %s142 = sld [smem:[#allocation6 + $0x2]]
    %s143 = sld [smem:[#allocation6 + $0x3]]
    %s144 = sld [smem:[#allocation6 + $0x4]]
    %s145 = sld [smem:[#allocation6 + $0x5]]
    %s146 = sld [smem:[#allocation6 + $0x6]]
    %s147 = sld [smem:[#allocation6 + $0x7]]
    %s148 = sld [smem:[#allocation6 + $0x8]]
    %s149 = sld [smem:[#allocation6 + $0x9]]
    %s150 = sld [smem:[#allocation6 + $0x80]]
    %s151 = sld [smem:[#allocation6 + $0x81]]
    %s152 = sld [smem:[#allocation6 + $0x82]]
    %s153 = sld [smem:[#allocation6 + $0x83]]
    %s154 = sld [smem:[#allocation6 + $0x84]]
    %s155 = sld [smem:[#allocation6 + $0x85]]
    %s156 = sld [smem:[#allocation6 + $0x86]]
    %s157 = sld [smem:[#allocation6 + $0x87]]
    %s158 = sld [smem:[#allocation6 + $0x88]]
    %s159 = sld [smem:[#allocation6 + $0x89]]
    %s160 = sld [smem:[#allocation7]]
    %s161 = sld [smem:[#allocation7 + $0x1]]
    loop: start=0, step=1, limit=2
    $region38: #{_lambda_.1} parent=1 // loop_pre_header
      _
    $region39: #{_lambda_.1} parent=1 // loop_header
      %s163 = sphi 0, %s167
      %p164 = scmp.ge.s32.totalorder %s163, 2
    $region40: #{_lambda_.1} parent=1 // loop_header_branch
      %166 = sbr.rel (%p164) target = $region44
    $region41: #{_lambda_.1} parent=1 // loop_body
      %s168 = smul.u32 %s163, 16
      %s169 = scalar_lea.vmem %s4, %s168
      %v170 = vld [vmem:[%s169] sm:$0xff]
      %v171 = vld [vmem:[%s169 + $0x8] sm:$0xff]
      %s172 = sadd.s32 %s168, 32
      %s173 = scalar_lea.vmem %s4, %s172
      %v174 = vld [vmem:[%s173] sm:$0xff]
      %v175 = vld [vmem:[%s173 + $0x8] sm:$0xff]
      %s176 = sadd.s32 %s168, 64
      %s177 = scalar_lea.vmem %s4, %s176
      %v178 = vld [vmem:[%s177] sm:$0xff]
      %v179 = vld [vmem:[%s177 + $0x8] sm:$0xff]
      %s180 = sadd.s32 %s168, 96
      %s181 = scalar_lea.vmem %s4, %s180
      %v182 = vld [vmem:[%s181] sm:$0xff]
      %v183 = vld [vmem:[%s181 + $0x8] sm:$0xff]
      %s184 = sadd.s32 %s168, 128
      %s185 = scalar_lea.vmem %s4, %s184
      %v186 = vld [vmem:[%s185] sm:$0xff]
      %v187 = vld [vmem:[%s185 + $0x8] sm:$0xff]
      %s188 = sadd.s32 %s168, 160
      %s189 = scalar_lea.vmem %s4, %s188
      %v190 = vld [vmem:[%s189] sm:$0xff]
      %v191 = vld [vmem:[%s189 + $0x8] sm:$0xff]
      %v192 = vstv %s70
      %v193 = vmul.f32 %v170, %v192
      %v194 = vmul.f32 %v171, %v192
      %v195 = vstv %s71
      %v196 = vmul.f32 %v174, %v195
      %v197 = vmul.f32 %v175, %v195
      %v198 = vadd.f32 %v193, %v196
      %v199 = vadd.f32 %v194, %v197
      %v200 = vstv %s72
      %v201 = vmul.f32 %v178, %v200
      %v202 = vmul.f32 %v179, %v200
      %v203 = vadd.f32 %v198, %v201
      %v204 = vadd.f32 %v199, %v202
      %v205 = vstv %s73
      %v206 = vmul.f32 %v182, %v205
      %v207 = vmul.f32 %v183, %v205
      %v208 = vadd.f32 %v203, %v206
      %v209 = vadd.f32 %v204, %v207
      %v210 = vstv %s74
      %v211 = vmul.f32 %v186, %v210
      %v212 = vmul.f32 %v187, %v210
      %v213 = vadd.f32 %v208, %v211
      %v214 = vadd.f32 %v209, %v212
      %v215 = vstv %s75
      %v216 = vmul.f32 %v190, %v215
      %v217 = vmul.f32 %v191, %v215
      %v218 = vadd.f32 %v213, %v216
      %v219 = vadd.f32 %v214, %v217
      %v220 = vstv %s130
      %v221 = vadd.f32 %v218, %v220
      %v222 = vadd.f32 %v219, %v220
      %v223 = vmax.f32 %v221, 0.0
      %v224 = vmax.f32 %v222, 0.0
      %v225 = vstv %s140
      %v226 = vmul.f32 %v223, %v225
      %v227 = vmul.f32 %v224, %v225
      %v228 = vadd.f32 %v226, 0.0
      %v229 = vadd.f32 %v227, 0.0
      %v230 = vstv %s150
      %v231 = vmul.f32 %v223, %v230
      %v232 = vmul.f32 %v224, %v230
      %v233 = vadd.f32 %v231, 0.0
      %v234 = vadd.f32 %v232, 0.0
      %v235 = vstv %s76
      %v236 = vmul.f32 %v170, %v235
      %v237 = vmul.f32 %v171, %v235
      %v238 = vstv %s77
      %v239 = vmul.f32 %v174, %v238
      %v240 = vmul.f32 %v175, %v238
      %v241 = vadd.f32 %v236, %v239
      %v242 = vadd.f32 %v237, %v240
      %v243 = vstv %s78
      %v244 = vmul.f32 %v178, %v243
      %v245 = vmul.f32 %v179, %v243
      %v246 = vadd.f32 %v241, %v244
      %v247 = vadd.f32 %v242, %v245
      %v248 = vstv %s79
      %v249 = vmul.f32 %v182, %v248
      %v250 = vmul.f32 %v183, %v248
      %v251 = vadd.f32 %v246, %v249
      %v252 = vadd.f32 %v247, %v250
      %v253 = vstv %s80
      %v254 = vmul.f32 %v186, %v253
      %v255 = vmul.f32 %v187, %v253
      %v256 = vadd.f32 %v251, %v254
      %v257 = vadd.f32 %v252, %v255
      %v258 = vstv %s81
      %v259 = vmul.f32 %v190, %v258
      %v260 = vmul.f32 %v191, %v258
      %v261 = vadd.f32 %v256, %v259
      %v262 = vadd.f32 %v257, %v260
      %v263 = vstv %s131
      %v264 = vadd.f32 %v261, %v263
      %v265 = vadd.f32 %v262, %v263
      %v266 = vmax.f32 %v264, 0.0
      %v267 = vmax.f32 %v265, 0.0
      %v268 = vstv %s141
      %v269 = vmul.f32 %v266, %v268
      %v270 = vmul.f32 %v267, %v268
      %v271 = vadd.f32 %v228, %v269
      %v272 = vadd.f32 %v229, %v270
      %v273 = vstv %s151
      %v274 = vmul.f32 %v266, %v273
      %v275 = vmul.f32 %v267, %v273
      %v276 = vadd.f32 %v233, %v274
      %v277 = vadd.f32 %v234, %v275
      %v278 = vstv %s82
      %v279 = vmul.f32 %v170, %v278
      %v280 = vmul.f32 %v171, %v278
      %v281 = vstv %s83
      %v282 = vmul.f32 %v174, %v281
      %v283 = vmul.f32 %v175, %v281
      %v284 = vadd.f32 %v279, %v282
      %v285 = vadd.f32 %v280, %v283
      %v286 = vstv %s84
      %v287 = vmul.f32 %v178, %v286
      %v288 = vmul.f32 %v179, %v286
      %v289 = vadd.f32 %v284, %v287
      %v290 = vadd.f32 %v285, %v288
      %v291 = vstv %s85
      %v292 = vmul.f32 %v182, %v291
      %v293 = vmul.f32 %v183, %v291
      %v294 = vadd.f32 %v289, %v292
      %v295 = vadd.f32 %v290, %v293
      %v296 = vstv %s86
      %v297 = vmul.f32 %v186, %v296
      %v298 = vmul.f32 %v187, %v296
      %v299 = vadd.f32 %v294, %v297
      %v300 = vadd.f32 %v295, %v298
      %v301 = vstv %s87
      %v302 = vmul.f32 %v190, %v301
      %v303 = vmul.f32 %v191, %v301
      %v304 = vadd.f32 %v299, %v302
      %v305 = vadd.f32 %v300, %v303
      %v306 = vstv %s132
      %v307 = vadd.f32 %v304, %v306
      %v308 = vadd.f32 %v305, %v306
      %v309 = vmax.f32 %v307, 0.0
      %v310 = vmax.f32 %v308, 0.0
      %v311 = vstv %s142
      %v312 = vmul.f32 %v309, %v311
      %v313 = vmul.f32 %v310, %v311
      %v314 = vadd.f32 %v271, %v312
      %v315 = vadd.f32 %v272, %v313
      %v316 = vstv %s152
      %v317 = vmul.f32 %v309, %v316
      %v318 = vmul.f32 %v310, %v316
      %v319 = vadd.f32 %v276, %v317
      %v320 = vadd.f32 %v277, %v318
      %v321 = vstv %s88
      %v322 = vmul.f32 %v170, %v321
      %v323 = vmul.f32 %v171, %v321
      %v324 = vstv %s89
      %v325 = vmul.f32 %v174, %v324
      %v326 = vmul.f32 %v175, %v324
      %v327 = vadd.f32 %v322, %v325
      %v328 = vadd.f32 %v323, %v326
      %v329 = vstv %s90
      %v330 = vmul.f32 %v178, %v329
      %v331 = vmul.f32 %v179, %v329
      %v332 = vadd.f32 %v327, %v330
      %v333 = vadd.f32 %v328, %v331
      %v334 = vstv %s91
      %v335 = vmul.f32 %v182, %v334
      %v336 = vmul.f32 %v183, %v334
      %v337 = vadd.f32 %v332, %v335
      %v338 = vadd.f32 %v333, %v336
      %v339 = vstv %s92
      %v340 = vmul.f32 %v186, %v339
      %v341 = vmul.f32 %v187, %v339
      %v342 = vadd.f32 %v337, %v340
      %v343 = vadd.f32 %v338, %v341
      %v344 = vstv %s93
      %v345 = vmul.f32 %v190, %v344
      %v346 = vmul.f32 %v191, %v344
      %v347 = vadd.f32 %v342, %v345
      %v348 = vadd.f32 %v343, %v346
      %v349 = vstv %s133
      %v350 = vadd.f32 %v347, %v349
      %v351 = vadd.f32 %v348, %v349
      %v352 = vmax.f32 %v350, 0.0
      %v353 = vmax.f32 %v351, 0.0
      %v354 = vstv %s143
      %v355 = vmul.f32 %v352, %v354
      %v356 = vmul.f32 %v353, %v354
      %v357 = vadd.f32 %v314, %v355
      %v358 = vadd.f32 %v315, %v356
      %v359 = vstv %s153
      %v360 = vmul.f32 %v352, %v359
      %v361 = vmul.f32 %v353, %v359
      %v362 = vadd.f32 %v319, %v360
      %v363 = vadd.f32 %v320, %v361
      %v364 = vstv %s94
      %v365 = vmul.f32 %v170, %v364
      %v366 = vmul.f32 %v171, %v364
      %v367 = vstv %s95
      %v368 = vmul.f32 %v174, %v367
      %v369 = vmul.f32 %v175, %v367
      %v370 = vadd.f32 %v365, %v368
      %v371 = vadd.f32 %v366, %v369
      %v372 = vstv %s96
      %v373 = vmul.f32 %v178, %v372
      %v374 = vmul.f32 %v179, %v372
      %v375 = vadd.f32 %v370, %v373
      %v376 = vadd.f32 %v371, %v374
      %v377 = vstv %s97
      %v378 = vmul.f32 %v182, %v377
      %v379 = vmul.f32 %v183, %v377
      %v380 = vadd.f32 %v375, %v378
      %v381 = vadd.f32 %v376, %v379
      %v382 = vstv %s98
      %v383 = vmul.f32 %v186, %v382
      %v384 = vmul.f32 %v187, %v382
      %v385 = vadd.f32 %v380, %v383
      %v386 = vadd.f32 %v381, %v384
      %v387 = vstv %s99
      %v388 = vmul.f32 %v190, %v387
      %v389 = vmul.f32 %v191, %v387
      %v390 = vadd.f32 %v385, %v388
      %v391 = vadd.f32 %v386, %v389
      %v392 = vstv %s134
      %v393 = vadd.f32 %v390, %v392
      %v394 = vadd.f32 %v391, %v392
      %v395 = vmax.f32 %v393, 0.0
      %v396 = vmax.f32 %v394, 0.0
      %v397 = vstv %s144
      %v398 = vmul.f32 %v395, %v397
      %v399 = vmul.f32 %v396, %v397
      %v400 = vadd.f32 %v357, %v398
      %v401 = vadd.f32 %v358, %v399
      %v402 = vstv %s154
      %v403 = vmul.f32 %v395, %v402
      %v404 = vmul.f32 %v396, %v402
      %v405 = vadd.f32 %v362, %v403
      %v406 = vadd.f32 %v363, %v404
      %v407 = vstv %s100
      %v408 = vmul.f32 %v170, %v407
      %v409 = vmul.f32 %v171, %v407
      %v410 = vstv %s101
      %v411 = vmul.f32 %v174, %v410
      %v412 = vmul.f32 %v175, %v410
      %v413 = vadd.f32 %v408, %v411
      %v414 = vadd.f32 %v409, %v412
      %v415 = vstv %s102
      %v416 = vmul.f32 %v178, %v415
      %v417 = vmul.f32 %v179, %v415
      %v418 = vadd.f32 %v413, %v416
      %v419 = vadd.f32 %v414, %v417
      %v420 = vstv %s103
      %v421 = vmul.f32 %v182, %v420
      %v422 = vmul.f32 %v183, %v420
      %v423 = vadd.f32 %v418, %v421
      %v424 = vadd.f32 %v419, %v422
      %v425 = vstv %s104
      %v426 = vmul.f32 %v186, %v425
      %v427 = vmul.f32 %v187, %v425
      %v428 = vadd.f32 %v423, %v426
      %v429 = vadd.f32 %v424, %v427
      %v430 = vstv %s105
      %v431 = vmul.f32 %v190, %v430
      %v432 = vmul.f32 %v191, %v430
      %v433 = vadd.f32 %v428, %v431
      %v434 = vadd.f32 %v429, %v432
      %v435 = vstv %s135
      %v436 = vadd.f32 %v433, %v435
      %v437 = vadd.f32 %v434, %v435
      %v438 = vmax.f32 %v436, 0.0
      %v439 = vmax.f32 %v437, 0.0
      %v440 = vstv %s145
      %v441 = vmul.f32 %v438, %v440
      %v442 = vmul.f32 %v439, %v440
      %v443 = vadd.f32 %v400, %v441
      %v444 = vadd.f32 %v401, %v442
      %v445 = vstv %s155
      %v446 = vmul.f32 %v438, %v445
      %v447 = vmul.f32 %v439, %v445
      %v448 = vadd.f32 %v405, %v446
      %v449 = vadd.f32 %v406, %v447
      %v450 = vstv %s106
      %v451 = vmul.f32 %v170, %v450
      %v452 = vmul.f32 %v171, %v450
      %v453 = vstv %s107
      %v454 = vmul.f32 %v174, %v453
      %v455 = vmul.f32 %v175, %v453
      %v456 = vadd.f32 %v451, %v454
      %v457 = vadd.f32 %v452, %v455
      %v458 = vstv %s108
      %v459 = vmul.f32 %v178, %v458
      %v460 = vmul.f32 %v179, %v458
      %v461 = vadd.f32 %v456, %v459
      %v462 = vadd.f32 %v457, %v460
      %v463 = vstv %s109
      %v464 = vmul.f32 %v182, %v463
      %v465 = vmul.f32 %v183, %v463
      %v466 = vadd.f32 %v461, %v464
      %v467 = vadd.f32 %v462, %v465
      %v468 = vstv %s110
      %v469 = vmul.f32 %v186, %v468
      %v470 = vmul.f32 %v187, %v468
      %v471 = vadd.f32 %v466, %v469
      %v472 = vadd.f32 %v467, %v470
      %v473 = vstv %s111
      %v474 = vmul.f32 %v190, %v473
      %v475 = vmul.f32 %v191, %v473
      %v476 = vadd.f32 %v471, %v474
      %v477 = vadd.f32 %v472, %v475
      %v478 = vstv %s136
      %v479 = vadd.f32 %v476, %v478
      %v480 = vadd.f32 %v477, %v478
      %v481 = vmax.f32 %v479, 0.0
      %v482 = vmax.f32 %v480, 0.0
      %v483 = vstv %s146
      %v484 = vmul.f32 %v481, %v483
      %v485 = vmul.f32 %v482, %v483
      %v486 = vadd.f32 %v443, %v484
      %v487 = vadd.f32 %v444, %v485
      %v488 = vstv %s156
      %v489 = vmul.f32 %v481, %v488
      %v490 = vmul.f32 %v482, %v488
      %v491 = vadd.f32 %v448, %v489
      %v492 = vadd.f32 %v449, %v490
      %v493 = vstv %s112
      %v494 = vmul.f32 %v170, %v493
      %v495 = vmul.f32 %v171, %v493
      %v496 = vstv %s113
      %v497 = vmul.f32 %v174, %v496
      %v498 = vmul.f32 %v175, %v496
      %v499 = vadd.f32 %v494, %v497
      %v500 = vadd.f32 %v495, %v498
      %v501 = vstv %s114
      %v502 = vmul.f32 %v178, %v501
      %v503 = vmul.f32 %v179, %v501
      %v504 = vadd.f32 %v499, %v502
      %v505 = vadd.f32 %v500, %v503
      %v506 = vstv %s115
      %v507 = vmul.f32 %v182, %v506
      %v508 = vmul.f32 %v183, %v506
      %v509 = vadd.f32 %v504, %v507
      %v510 = vadd.f32 %v505, %v508
      %v511 = vstv %s116
      %v512 = vmul.f32 %v186, %v511
      %v513 = vmul.f32 %v187, %v511
      %v514 = vadd.f32 %v509, %v512
      %v515 = vadd.f32 %v510, %v513
      %v516 = vstv %s117
      %v517 = vmul.f32 %v190, %v516
      %v518 = vmul.f32 %v191, %v516
      %v519 = vadd.f32 %v514, %v517
      %v520 = vadd.f32 %v515, %v518
      %v521 = vstv %s137
      %v522 = vadd.f32 %v519, %v521
      %v523 = vadd.f32 %v520, %v521
      %v524 = vmax.f32 %v522, 0.0
      %v525 = vmax.f32 %v523, 0.0
      %v526 = vstv %s147
      %v527 = vmul.f32 %v524, %v526
      %v528 = vmul.f32 %v525, %v526
      %v529 = vadd.f32 %v486, %v527
      %v530 = vadd.f32 %v487, %v528
      %v531 = vstv %s157
      %v532 = vmul.f32 %v524, %v531
      %v533 = vmul.f32 %v525, %v531
      %v534 = vadd.f32 %v491, %v532
      %v535 = vadd.f32 %v492, %v533
      %v536 = vstv %s118
      %v537 = vmul.f32 %v170, %v536
      %v538 = vmul.f32 %v171, %v536
      %v539 = vstv %s119
      %v540 = vmul.f32 %v174, %v539
      %v541 = vmul.f32 %v175, %v539
      %v542 = vadd.f32 %v537, %v540
      %v543 = vadd.f32 %v538, %v541
      %v544 = vstv %s120
      %v545 = vmul.f32 %v178, %v544
      %v546 = vmul.f32 %v179, %v544
      %v547 = vadd.f32 %v542, %v545
      %v548 = vadd.f32 %v543, %v546
      %v549 = vstv %s121
      %v550 = vmul.f32 %v182, %v549
      %v551 = vmul.f32 %v183, %v549
      %v552 = vadd.f32 %v547, %v550
      %v553 = vadd.f32 %v548, %v551
      %v554 = vstv %s122
      %v555 = vmul.f32 %v186, %v554
      %v556 = vmul.f32 %v187, %v554
      %v557 = vadd.f32 %v552, %v555
      %v558 = vadd.f32 %v553, %v556
      %v559 = vstv %s123
      %v560 = vmul.f32 %v190, %v559
      %v561 = vmul.f32 %v191, %v559
      %v562 = vadd.f32 %v557, %v560
      %v563 = vadd.f32 %v558, %v561
      %v564 = vstv %s138
      %v565 = vadd.f32 %v562, %v564
      %v566 = vadd.f32 %v563, %v564
      %v567 = vmax.f32 %v565, 0.0
      %v568 = vmax.f32 %v566, 0.0
      %v569 = vstv %s148
      %v570 = vmul.f32 %v567, %v569
      %v571 = vmul.f32 %v568, %v569
      %v572 = vadd.f32 %v529, %v570
      %v573 = vadd.f32 %v530, %v571
      %v574 = vstv %s158
      %v575 = vmul.f32 %v567, %v574
      %v576 = vmul.f32 %v568, %v574
      %v577 = vadd.f32 %v534, %v575
      %v578 = vadd.f32 %v535, %v576
      %v579 = vstv %s124
      %v580 = vmul.f32 %v170, %v579
      %v581 = vmul.f32 %v171, %v579
      %v582 = vstv %s125
      %v583 = vmul.f32 %v174, %v582
      %v584 = vmul.f32 %v175, %v582
      %v585 = vadd.f32 %v580, %v583
      %v586 = vadd.f32 %v581, %v584
      %v587 = vstv %s126
      %v588 = vmul.f32 %v178, %v587
      %v589 = vmul.f32 %v179, %v587
      %v590 = vadd.f32 %v585, %v588
      %v591 = vadd.f32 %v586, %v589
      %v592 = vstv %s127
      %v593 = vmul.f32 %v182, %v592
      %v594 = vmul.f32 %v183, %v592
      %v595 = vadd.f32 %v590, %v593
      %v596 = vadd.f32 %v591, %v594
      %v597 = vstv %s128
      %v598 = vmul.f32 %v186, %v597
      %v599 = vmul.f32 %v187, %v597
      %v600 = vadd.f32 %v595, %v598
      %v601 = vadd.f32 %v596, %v599
      %v602 = vstv %s129
      %v603 = vmul.f32 %v190, %v602
      %v604 = vmul.f32 %v191, %v602
      %v605 = vadd.f32 %v600, %v603
      %v606 = vadd.f32 %v601, %v604
      %v607 = vstv %s139
      %v608 = vadd.f32 %v605, %v607
      %v609 = vadd.f32 %v606, %v607
      %v610 = vmax.f32 %v608, 0.0
      %v611 = vmax.f32 %v609, 0.0
      %v612 = vstv %s149
      %v613 = vmul.f32 %v610, %v612
      %v614 = vmul.f32 %v611, %v612
      %v615 = vadd.f32 %v572, %v613
      %v616 = vadd.f32 %v573, %v614
      %v617 = vstv %s159
      %v618 = vmul.f32 %v610, %v617
      %v619 = vmul.f32 %v611, %v617
      %v620 = vadd.f32 %v577, %v618
      %v621 = vadd.f32 %v578, %v619
      %v622 = vstv %s160
      %v623 = vadd.f32 %v615, %v622
      %v624 = vadd.f32 %v616, %v622
      %s625 = scalar_lea.vmem %s5, %s168
      %626 = vst [vmem:[%s625] sm:$0xff] %v623
      %627 = vst [vmem:[%s625 + $0x8] sm:$0xff] %v624
      %v628 = vstv %s161
      %v629 = vadd.f32 %v620, %v628
      %v630 = vadd.f32 %v621, %v628
      %s631 = scalar_lea.vmem %s5, %s172
      %632 = vst [vmem:[%s631] sm:$0xff] %v629
      %633 = vst [vmem:[%s631 + $0x8] sm:$0xff] %v630
    $region42: #{_lambda_.1} parent=1 // loop_footer
      %s167 = sadd.s32 1, %s163
    $region43: #{_lambda_.1} parent=1 // loop_footer_branch
      %162 = sbr.rel target = $region39
    $region44: #{_lambda_.1} parent=1 // loop_exit
      _
    // Predicated region
    $region45: #{_lambda_.1} parent=1 // pred_check
      _
    $region46: #{_lambda_.1} parent=1 // pred_check_branch
      %635 = sbr.rel (0) target = $region48
    $region47: #{_lambda_.1} parent=1 // pred_region
      _
    $region48: #{_lambda_.1} parent=1 // pred_fallthru
      _
    // Predicated region
    $region49: #{_lambda_.1} parent=1 // pred_check
      _
    $region50: #{_lambda_.1} parent=1 // pred_check_branch
      %637 = sbr.rel (0) target = $region52
    $region51: #{_lambda_.1} parent=1 // pred_region
      _
    $region52: #{_lambda_.1} parent=1 // pred_fallthru
      _
    %638 = vsyncpa [#allocation3], 1
    %639 = vsyncpa [#allocation5], 1
    %640 = vsyncpa [#allocation8], 1

</llo_original>
